<compile_context>
chip_gen: v7x
topology: tpu7x:2x2x1
jax: 0.10.0
libtpu: 0.0.40
codegen_flags: <defaults>
</compile_context>

<pallas_src>
import functools

import jax
import jax.numpy as jnp
from jax.experimental import pallas as pl
from jax.experimental.pallas import tpu as pltpu

EMBED_DIM = 32        # embedding_dim for this synthetic instantiation
HIDDEN = 64           # fixed by the module (projection / fc / layer_norm width)
LN_EPS = 1e-5
DEFAULT_TILE_B = 2048  # rows per grid step; fits comfortably in scoped VMEM on
                       # v5e (16 MiB) / v6e (32 MiB) / v7x (32 MiB, 64 MiB phys per TC)


def _round_up(n, m):
    return ((n + m - 1) // m) * m


def _gelu_exact(x):
    # PyTorch nn.GELU() default = exact erf formulation.
    # TODO(synk): optionally switch to tanh-approx GELU (EUP path) on v5e if the
    # tolerance budget allows.
    return 0.5 * x * (1.0 + jax.lax.erf(x * (1.0 / jnp.sqrt(2.0).astype(x.dtype))))


def projection_head_kernel(x_ref, w1_ref, w2_ref, params_ref, o_ref):
    """params_ref rows: 0=b1, 1=b2, 2=gamma(LN weight), 3=beta(LN bias)."""
    x = x_ref[...]                                            # (TILE_B, D) f32
    w1 = w1_ref[...]                                          # (D, 64)
    w2 = w2_ref[...]                                          # (64, 64)
    b1 = params_ref[0, :]                                     # (64,)
    b2 = params_ref[1, :]
    gamma = params_ref[2, :]
    beta = params_ref[3, :]

    # projection: x @ W1^T + b1
    projected = jnp.dot(x, w1, preferred_element_type=jnp.float32) + b1

    # GELU (exact erf, PyTorch default)
    h = _gelu_exact(projected)

    # fc: h @ W2^T + b2
    y = jnp.dot(h, w2, preferred_element_type=jnp.float32) + b2

    # Dropout(p=0.3): identity in eval mode.
    # TODO(synk): training-mode dropout with pltpu.prng_seed/prng_random_bits if needed.

    # residual
    y = y + projected

    # LayerNorm over last dim (64), biased variance, eps=1e-5
    mean = jnp.mean(y, axis=-1, keepdims=True)
    centered = y - mean
    var = jnp.mean(centered * centered, axis=-1, keepdims=True)
    inv_std = jax.lax.rsqrt(var + LN_EPS)
    out = centered * inv_std * gamma + beta

    o_ref[...] = out.astype(o_ref.dtype)


@functools.partial(jax.jit, static_argnames=("tile_b",))
def projection_head(x, w1, b1, w2, b2, gamma, beta, *, tile_b=DEFAULT_TILE_B):
    """x: (B, D) f32.  w1: (D, 64), b1: (64,), w2: (64, 64), b2: (64,),
    gamma/beta: (64,).  Returns (B, 64) f32."""
    B, D = x.shape

    # Tile the batch axis. Keep the tile a multiple of 8 (sublane) and no larger
    # than the (sublane-rounded) batch; pad the batch to a whole number of tiles
    # so the last tile never reads/writes out of range.
    tile = max(8, min(_round_up(tile_b, 8), _round_up(B, 8)))
    b_pad = _round_up(B, tile)
    if b_pad != B:
        x = jnp.pad(x, ((0, b_pad - B), (0, 0)))
    num_tiles = b_pad // tile

    # Stack the four small (64,) parameter vectors into one (4, 64) array so the
    # per-step bookkeeping is a single resident BlockSpec instead of four.
    params = jnp.stack([b1, b2, gamma, beta], axis=0)          # (4, HIDDEN)

    out = pl.pallas_call(
        projection_head_kernel,
        out_shape=jax.ShapeDtypeStruct((b_pad, HIDDEN), jnp.float32),
        grid_spec=pltpu.PrefetchScalarGridSpec(
            num_scalar_prefetch=0,
            grid=(num_tiles,),
            in_specs=[
                # x: streamed, double-buffered batch tiles.
                pl.BlockSpec((tile, D), lambda i: (i, 0)),
                # Weights / params: constant index map -> stay VMEM-resident.
                pl.BlockSpec((D, HIDDEN), lambda i: (0, 0)),
                pl.BlockSpec((HIDDEN, HIDDEN), lambda i: (0, 0)),
                pl.BlockSpec((4, HIDDEN), lambda i: (0, 0)),
            ],
            out_specs=pl.BlockSpec((tile, HIDDEN), lambda i: (i, 0)),
        ),
        compiler_params=pltpu.CompilerParams(
            # Batch tiles are independent -> shard across both TCs on v7x.
            dimension_semantics=("parallel",),
            vmem_limit_bytes=64 << 20,
        ),
    )(x, w1, w2, params)

    return out[:B] if b_pad != B else out


def reference(x, w1, b1, w2, b2, gamma, beta):
    projected = x @ w1 + b1
    h = _gelu_exact(projected)
    y = h @ w2 + b2
    y = y + projected
    mean = jnp.mean(y, axis=-1, keepdims=True)
    var = jnp.mean((y - mean) ** 2, axis=-1, keepdims=True)
    return (y - mean) * jax.lax.rsqrt(var + LN_EPS) * gamma + beta


if __name__ == "__main__":
    key = jax.random.PRNGKey(0)
    kx, k1, k2, k3, k4, kx2 = jax.random.split(key, 6)

    B = 8
    x = jax.random.normal(kx, (B, EMBED_DIM), dtype=jnp.float32)

    # Deterministic synthetic parameters (shapes follow nn.Linear / nn.LayerNorm),
    # weights stored pre-transposed: (in_features, out_features).
    w1 = jax.random.normal(k1, (EMBED_DIM, HIDDEN), dtype=jnp.float32) * 0.05
    b1 = jax.random.normal(k2, (HIDDEN,), dtype=jnp.float32) * 0.01
    w2 = jax.random.normal(k3, (HIDDEN, HIDDEN), dtype=jnp.float32) * 0.05
    b2 = jax.random.normal(k4, (HIDDEN,), dtype=jnp.float32) * 0.01
    gamma = jnp.ones((HIDDEN,), dtype=jnp.float32)
    beta = jnp.zeros((HIDDEN,), dtype=jnp.float32)

    # Small exact-shape case (single tile).
    out = jax.block_until_ready(projection_head(x, w1, b1, w2, b2, gamma, beta))
    ref = reference(x, w1, b1, w2, b2, gamma, beta)
    assert out.shape == (B, HIDDEN)
    assert jnp.allclose(out, ref, atol=1e-4, rtol=1e-4), "mismatch vs reference (B=8)"

    # Ragged-batch case: exercises batch tiling + padding path with a small tile.
    B2 = 20
    x2 = jax.random.normal(kx2, (B2, EMBED_DIM), dtype=jnp.float32)
    out2 = jax.block_until_ready(
        projection_head(x2, w1, b1, w2, b2, gamma, beta, tile_b=8))
    ref2 = reference(x2, w1, b1, w2, b2, gamma, beta)
    assert out2.shape == (B2, HIDDEN)
    assert jnp.allclose(out2, ref2, atol=1e-4, rtol=1e-4), "mismatch vs reference (B=20)"

    print("KERNEL_OK")
</pallas_src>

<mosaic_0001>
module attributes {stable_mosaic.version = 11 : i64} {
  func.func @projection_head_kernel(%arg0: i32, %arg1: memref<8x32xf32, #tpu.memory_space<vmem>>, %arg2: memref<32x64xf32, #tpu.memory_space<vmem>>, %arg3: memref<64x64xf32, #tpu.memory_space<vmem>>, %arg4: memref<4x64xf32, #tpu.memory_space<vmem>>, %arg5: memref<8x64xf32, #tpu.memory_space<vmem>>) attributes {dimension_semantics = [#tpu.dimension_semantics<parallel>], iteration_bounds = array<i64: 1>, scalar_prefetch = 0 : i64, scratch_operands = 0 : i64, tpu.core_type = #tpu.core_type<tc>, window_params = [{transform_indices = @transform_0, window_bounds = array<i64: 8, 32>}, {pipeline_mode = #tpu.pipeline_mode<synchronous>, transform_indices = @transform_1, window_bounds = array<i64: 32, 64>}, {pipeline_mode = #tpu.pipeline_mode<synchronous>, transform_indices = @transform_2, window_bounds = array<i64: 64, 64>}, {pipeline_mode = #tpu.pipeline_mode<synchronous>, transform_indices = @transform_3, window_bounds = array<i64: 4, 64>}, {transform_indices = @transform_4, window_bounds = array<i64: 8, 64>}]} {
    %c0 = arith.constant 0 : index
    %c0_0 = arith.constant 0 : index
    %0 = vector.load %arg1[%c0, %c0_0] : memref<8x32xf32, #tpu.memory_space<vmem>>, vector<8x32xf32>
    %c0_1 = arith.constant 0 : index
    %c0_2 = arith.constant 0 : index
    %1 = vector.load %arg2[%c0_1, %c0_2] : memref<32x64xf32, #tpu.memory_space<vmem>>, vector<32x64xf32>
    %c0_3 = arith.constant 0 : index
    %c0_4 = arith.constant 0 : index
    %2 = vector.load %arg3[%c0_3, %c0_4] : memref<64x64xf32, #tpu.memory_space<vmem>>, vector<64x64xf32>
    %c0_5 = arith.constant 0 : index
    %c0_6 = arith.constant 0 : index
    %3 = vector.load %arg4[%c0_5, %c0_6] : memref<4x64xf32, #tpu.memory_space<vmem>>, vector<1x64xf32>
    %4 = vector.shape_cast %3 : vector<1x64xf32> to vector<64xf32>
    %c1 = arith.constant 1 : index
    %c0_7 = arith.constant 0 : index
    %5 = vector.load %arg4[%c1, %c0_7] : memref<4x64xf32, #tpu.memory_space<vmem>>, vector<1x64xf32>
    %6 = vector.shape_cast %5 : vector<1x64xf32> to vector<64xf32>
    %c2 = arith.constant 2 : index
    %c0_8 = arith.constant 0 : index
    %7 = vector.load %arg4[%c2, %c0_8] : memref<4x64xf32, #tpu.memory_space<vmem>>, vector<1x64xf32>
    %8 = vector.shape_cast %7 : vector<1x64xf32> to vector<64xf32>
    %c3 = arith.constant 3 : index
    %c0_9 = arith.constant 0 : index
    %9 = vector.load %arg4[%c3, %c0_9] : memref<4x64xf32, #tpu.memory_space<vmem>>, vector<1x64xf32>
    %10 = vector.shape_cast %9 : vector<1x64xf32> to vector<64xf32>
    %cst = arith.constant dense<0.000000e+00> : vector<8x64xf32>
    %11 = tpu.matmul %0, %1, %cst {dimension_numbers = #tpu.dot_dimension_numbers<[1], [0], [0], [1], [0, 0, 1, 1], [], []>} : vector<8x32xf32>, vector<32x64xf32>, vector<8x64xf32> -> vector<8x64xf32>
    %12 = vector.shape_cast %4 : vector<64xf32> to vector<1x64xf32>
    %13 = vector.broadcast %12 : vector<1x64xf32> to vector<8x64xf32>
    %14 = arith.addf %11, %13 : vector<8x64xf32>
    %cst_10 = arith.constant 5.000000e-01 : f32
    %15 = vector.broadcast %cst_10 : f32 to vector<8x64xf32>
    %16 = arith.mulf %15, %14 : vector<8x64xf32>
    %cst_11 = arith.constant 2.000000e+00 : f32
    %17 = math.sqrt %cst_11 : f32
    %cst_12 = arith.constant 1.000000e+00 : f32
    %18 = arith.divf %cst_12, %17 : f32
    %19 = vector.broadcast %18 : f32 to vector<8x64xf32>
    %20 = arith.mulf %14, %19 : vector<8x64xf32>
    %21 = math.erf %20 : vector<8x64xf32>
    %cst_13 = arith.constant 1.000000e+00 : f32
    %22 = vector.broadcast %cst_13 : f32 to vector<8x64xf32>
    %23 = arith.addf %22, %21 : vector<8x64xf32>
    %24 = arith.mulf %16, %23 : vector<8x64xf32>
    %cst_14 = arith.constant dense<0.000000e+00> : vector<8x64xf32>
    %25 = tpu.matmul %24, %2, %cst_14 {dimension_numbers = #tpu.dot_dimension_numbers<[1], [0], [0], [1], [0, 0, 1, 1], [], []>} : vector<8x64xf32>, vector<64x64xf32>, vector<8x64xf32> -> vector<8x64xf32>
    %26 = vector.shape_cast %6 : vector<64xf32> to vector<1x64xf32>
    %27 = vector.broadcast %26 : vector<1x64xf32> to vector<8x64xf32>
    %28 = arith.addf %25, %27 : vector<8x64xf32>
    %29 = arith.addf %28, %14 : vector<8x64xf32>
    %cst_15 = arith.constant dense<0.000000e+00> : vector<8xf32>
    %30 = vector.multi_reduction <add>, %29, %cst_15 [1] : vector<8x64xf32> to vector<8xf32>
    %31 = vector.shape_cast %30 : vector<8xf32> to vector<8x1xf32>
    %cst_16 = arith.constant 6.400000e+01 : f32
    %32 = vector.broadcast %cst_16 : f32 to vector<8x1xf32>
    %33 = arith.divf %31, %32 : vector<8x1xf32>
    %34 = vector.broadcast %33 : vector<8x1xf32> to vector<8x64xf32>
    %35 = arith.subf %29, %34 : vector<8x64xf32>
    %36 = arith.mulf %35, %35 : vector<8x64xf32>
    %cst_17 = arith.constant dense<0.000000e+00> : vector<8xf32>
    %37 = vector.multi_reduction <add>, %36, %cst_17 [1] : vector<8x64xf32> to vector<8xf32>
    %38 = vector.shape_cast %37 : vector<8xf32> to vector<8x1xf32>
    %cst_18 = arith.constant 6.400000e+01 : f32
    %39 = vector.broadcast %cst_18 : f32 to vector<8x1xf32>
    %40 = arith.divf %38, %39 : vector<8x1xf32>
    %cst_19 = arith.constant 9.99999974E-6 : f32
    %41 = vector.broadcast %cst_19 : f32 to vector<8x1xf32>
    %42 = arith.addf %40, %41 : vector<8x1xf32>
    %43 = math.rsqrt %42 : vector<8x1xf32>
    %44 = vector.broadcast %43 : vector<8x1xf32> to vector<8x64xf32>
    %45 = arith.mulf %35, %44 : vector<8x64xf32>
    %46 = vector.shape_cast %8 : vector<64xf32> to vector<1x64xf32>
    %47 = vector.broadcast %46 : vector<1x64xf32> to vector<8x64xf32>
    %48 = arith.mulf %45, %47 : vector<8x64xf32>
    %49 = vector.shape_cast %10 : vector<64xf32> to vector<1x64xf32>
    %50 = vector.broadcast %49 : vector<1x64xf32> to vector<8x64xf32>
    %51 = arith.addf %48, %50 : vector<8x64xf32>
    %c0_20 = arith.constant 0 : index
    %c0_21 = arith.constant 0 : index
    %52 = vector.load %arg5[%c0_20, %c0_21] : memref<8x64xf32, #tpu.memory_space<vmem>>, vector<8x64xf32>
    tpu.vector_store %arg5[%c0_20, %c0_21], %51 {strides = array<i32>} : memref<8x64xf32, #tpu.memory_space<vmem>>, vector<8x64xf32>,
    return
  }
  func.func @transform_0(%arg0: i32) -> (i32, i32) {
    %c0_i32 = arith.constant 0 : i32
    %c0_i32_0 = arith.constant 0 : i32
    return %arg0, %c0_i32 : i32, i32
  }
  func.func @transform_1(%arg0: i32) -> (i32, i32) {
    %c0_i32 = arith.constant 0 : i32
    %c0_i32_0 = arith.constant 0 : i32
    %c0_i32_1 = arith.constant 0 : i32
    return %c0_i32, %c0_i32_0 : i32, i32
  }
  func.func @transform_2(%arg0: i32) -> (i32, i32) {
    %c0_i32 = arith.constant 0 : i32
    %c0_i32_0 = arith.constant 0 : i32
    %c0_i32_1 = arith.constant 0 : i32
    return %c0_i32, %c0_i32_0 : i32, i32
  }
  func.func @transform_3(%arg0: i32) -> (i32, i32) {
    %c0_i32 = arith.constant 0 : i32
    %c0_i32_0 = arith.constant 0 : i32
    %c0_i32_1 = arith.constant 0 : i32
    return %c0_i32, %c0_i32_0 : i32, i32
  }
  func.func @transform_4(%arg0: i32) -> (i32, i32) {
    %c0_i32 = arith.constant 0 : i32
    %c0_i32_0 = arith.constant 0 : i32
    return %arg0, %c0_i32 : i32, i32
  }
}

</mosaic_0001>

<llo_original>
// kernel: projection_head.1
$region0: #{projection_head.1}
  #allocation0 [shape = 'u32[]', space=smem, size = 0x4, offset = 0x4, fixed_abs, tag = 'smem constant byte address 0x4 - core index']
  #allocation1 [shape = 'u32[144,128]{1,0:T(1,128)}', space=vmem, size = 0x12000, scoped, tag = 'internal scratch']
  %s0 = inlined_call_operand.hbm [shape: f32[8,32], index: 0, kind: input, shape index: {}]
  %s1 = inlined_call_operand.hbm [shape: f32[32,64], index: 1, kind: input, shape index: {}]
  %s2 = inlined_call_operand.hbm [shape: f32[64,64], index: 2, kind: input, shape index: {}]
  %s3 = inlined_call_operand.hbm [shape: f32[4,64], index: 3, kind: input, shape index: {}]
  %s4 = inlined_call_operand.hbm [shape: f32[8,64], index: 4, kind: output, shape index: {}]
  %s5 = sld [smem:[#allocation0]]
  $region42: #{projection_head.1} parent=0
    _
  %s7 = ssub.s32 1, %s5
  %s8 = scalar_select 0, %s7, %s5
  $region1: #{projection_head.1} parent=0
    #allocation2 [shape = 'u8[4096]{0}', space=vmem, size = 0x1000, scoped, tag = 'input window, operand 0, single buffered']
    #allocation3 [shape = 's32[1]{0}', space=sflag, size = 0x4, scoped, tag = 'scoped memory for projection_head.1']
    #allocation4 [shape = 's32[1]{0}', space=sflag, size = 0x4, scoped, tag = 'scoped memory for projection_head.1']
    #allocation5 [shape = 'u8[16384]{0}', space=vmem, size = 0x4000, scoped, tag = 'input window, operand 1, single buffered']
    #allocation6 [shape = 's32[1]{0}', space=sflag, size = 0x4, scoped, tag = 'scoped memory for projection_head.1']
    #allocation7 [shape = 'u8[32768]{0}', space=vmem, size = 0x8000, scoped, tag = 'input window, operand 2, single buffered']
    #allocation8 [shape = 'u8[2048]{0}', space=vmem, size = 0x800, scoped, tag = 'input window, operand 3, single buffered']
    #allocation9 [shape = 's32[1]{0}', space=sflag, size = 0x4, scoped, tag = 'scoped memory for projection_head.1']
    #allocation10 [shape = 'u8[4096]{0}', space=vmem, size = 0x1000, scoped, tag = 'output window, operand 0, single buffered']
    %9 = vsyncpa [#allocation3], 0
    %10 = vsyncpa [#allocation6], 0
    %11 = vsyncpa [#allocation9], 0
    %12 = vsyncpa [#allocation4], 0
    // Predicated region
    $region2: #{projection_head.1} parent=1 // pred_check
      _
    $region3: #{projection_head.1} parent=1 // pred_check_branch
      %14 = sbr.rel (0) target = $region5
    $region4: #{projection_head.1} parent=1 // pred_region
      %s16 = ssub.s32 128, 128
      %17 = vsyncadd [#allocation3], %s16
      %s19 = sshll.u32 [#allocation2], 4
      %s20 = int_to_ptr.vmem [resolvable:$true] %s19
      %22 = dma.hbm_to_vmem [thread:$0]  %s0, 128, %s20, [#allocation3]
    $region5: #{projection_head.1} parent=1 // pred_fallthru
      _
    // Predicated region
    $region6: #{projection_head.1} parent=1 // pred_check
      _
    $region7: #{projection_head.1} parent=1 // pred_check_branch
      %24 = sbr.rel (0) target = $region9
    $region8: #{projection_head.1} parent=1 // pred_region
      %s26 = ssub.s32 512, 512
      %27 = vsyncadd [#allocation6], %s26
      %s28 = sshll.u32 [#allocation5], 4
      %s29 = int_to_ptr.vmem [resolvable:$true] %s28
      %34 = dma.hbm_to_vmem [thread:$0]  %s1, 512, %s29, [#allocation6], 128, 128, 8
    $region9: #{projection_head.1} parent=1 // pred_fallthru
      _
    // Predicated region
    $region10: #{projection_head.1} parent=1 // pred_check
      _
    $region11: #{projection_head.1} parent=1 // pred_check_branch
      %36 = sbr.rel (0) target = $region13
    $region12: #{projection_head.1} parent=1 // pred_region
      %s38 = ssub.s32 1024, 1024
      %39 = vsyncadd [#allocation6], %s38
      %s40 = sshll.u32 [#allocation7], 4
      %s41 = int_to_ptr.vmem [resolvable:$true] %s40
      %46 = dma.hbm_to_vmem [thread:$0]  %s2, 1024, %s41, [#allocation6], 128, 128, 8
    $region13: #{projection_head.1} parent=1 // pred_fallthru
      _
    // Predicated region
    $region14: #{projection_head.1} parent=1 // pred_check
      _
    $region15: #{projection_head.1} parent=1 // pred_check_branch
      %48 = sbr.rel (0) target = $region17
    $region16: #{projection_head.1} parent=1 // pred_region
      %s50 = ssub.s32 64, 64
      %51 = vsyncadd [#allocation9], %s50
      %s53 = sshll.u32 [#allocation8], 4
      %s54 = int_to_ptr.vmem [resolvable:$true] %s53
      %56 = dma.hbm_to_vmem [thread:$0]  %s3, 64, %s54, [#allocation9]
    $region17: #{projection_head.1} parent=1 // pred_fallthru
      _
    // Predicated region
    $region18: #{projection_head.1} parent=1 // pred_check
      _
    $region19: #{projection_head.1} parent=1 // pred_check_branch
      %58 = sbr.rel (0) target = $region21
    $region20: #{projection_head.1} parent=1 // pred_region
      %59 = dma.done [#allocation3], 128
    $region21: #{projection_head.1} parent=1 // pred_fallthru
      _
    // Predicated region
    $region22: #{projection_head.1} parent=1 // pred_check
      _
    $region23: #{projection_head.1} parent=1 // pred_check_branch
      %61 = sbr.rel (0) target = $region25
    $region24: #{projection_head.1} parent=1 // pred_region
      %62 = dma.done [#allocation6], 512
    $region25: #{projection_head.1} parent=1 // pred_fallthru
      _
    // Predicated region
    $region26: #{projection_head.1} parent=1 // pred_check
      _
    $region27: #{projection_head.1} parent=1 // pred_check_branch
      %64 = sbr.rel (0) target = $region29
    $region28: #{projection_head.1} parent=1 // pred_region
      %65 = dma.done [#allocation6], 1024
    $region29: #{projection_head.1} parent=1 // pred_fallthru
      _
    // Predicated region
    $region30: #{projection_head.1} parent=1 // pred_check
      _
    $region31: #{projection_head.1} parent=1 // pred_check_branch
      %67 = sbr.rel (0) target = $region33
    $region32: #{projection_head.1} parent=1 // pred_region
      %68 = dma.done [#allocation9], 64
    $region33: #{projection_head.1} parent=1 // pred_fallthru
      _
    %v69 = vld [vmem:[#allocation2] sm:$0xff]
    %v70 = vld [vmem:[#allocation5] sm:$0xff]
    %v71 = vld [vmem:[#allocation5 + $0x8] sm:$0xff]
    %v72 = vld [vmem:[#allocation5 + $0x10] sm:$0xff]
    %v73 = vld [vmem:[#allocation5 + $0x18] sm:$0xff]
    %v74 = vld [vmem:[#allocation7] sm:$0xff]
    %v75 = vld [vmem:[#allocation7 + $0x8] sm:$0xff]
    %v76 = vld [vmem:[#allocation7 + $0x10] sm:$0xff]
    %v77 = vld [vmem:[#allocation7 + $0x18] sm:$0xff]
    %v78 = vld [vmem:[#allocation7 + $0x20] sm:$0xff]
    %v79 = vld [vmem:[#allocation7 + $0x28] sm:$0xff]
    %v80 = vld [vmem:[#allocation7 + $0x30] sm:$0xff]
    %v81 = vld [vmem:[#allocation7 + $0x38] sm:$0xff]
    %v82 = vld [vmem:[#allocation8] sm:$0x1]
    %v83 = vld [vmem:[#allocation8 + $0x1] sm:$0x1]
    %v84 = vld [vmem:[#allocation8 + $0x2] sm:$0x1]
    %v85 = vld [vmem:[#allocation8 + $0x3] sm:$0x1]
    %v86 = vlaneseq
    %v87 = vshrl.u32 %v86, 7
    %v88 = vsub.s32 0, %v87
    %v89 = vrot.slane %v82, %v88
    %vm90 = vcmask 261120
    %v92 = vsel %vm90, %v69, 0
    %94 = vmatprep.subr.mxu0 0.0
    %95 = vmatpush1.msra.mxu0 %v70
    %96 = vmatprep.subr.mxu0 0.0
    %97 = vmatpush1.msra.mxu0 %v71
    %98 = vmatprep.subr.mxu0 0.0
    %99 = vmatpush1.msra.mxu0 %v72
    %100 = vmatprep.subr.mxu0 0.0
    %101 = vmatpush1.msra.mxu0 %v73
    %102 = vmatprep.subr.mxu0 0.0
    %103 = vmatpush1.msra.mxu0 0.0
    %104 = vmatprep.subr.mxu0 0.0
    %105 = vmatpush1.msra.mxu0 0.0
    %106 = vmatprep.subr.mxu0 0.0
    %107 = vmatpush1.msra.mxu0 0.0
    %108 = vmatprep.subr.mxu0 0.0
    %109 = vmatpush1.msra.mxu0 0.0
    %110 = vmatprep.subr.mxu0 0.0
    %111 = vmatpush1.msra.mxu0 0.0
    %112 = vmatprep.subr.mxu0 0.0
    %113 = vmatpush1.msra.mxu0 0.0
    %114 = vmatprep.subr.mxu0 0.0
    %115 = vmatpush1.msra.mxu0 0.0
    %116 = vmatprep.subr.mxu0 0.0
    %117 = vmatpush1.msra.mxu0 0.0
    %118 = vmatprep.subr.mxu0 0.0
    %119 = vmatpush1.msra.mxu0 0.0
    %120 = vmatprep.subr.mxu0 0.0
    %121 = vmatpush1.msra.mxu0 0.0
    %122 = vmatprep.subr.mxu0 0.0
    %123 = vmatpush1.msra.mxu0 0.0
    %124 = vmatprep.subr.mxu0 0.0
    %125 = vmatpush1.msra.mxu0 0.0
    %126 = vmatprep.subr.mxu0 0.0
    %127 = vmatpush1.msra.mxu0 0.0
    %128 = vmatprep.subr.mxu0 0.0
    %129 = vmatpush1.msra.mxu0 0.0
    %130 = vmatprep.subr.mxu0 0.0
    %131 = vmatpush1.msra.mxu0 0.0
    %132 = vmatprep.subr.mxu0 0.0
    %133 = vmatpush1.msra.mxu0 0.0
    %134 = vmatprep.subr.mxu0 0.0
    %135 = vmatpush1.msra.mxu0 0.0
    %136 = vmatprep.subr.mxu0 0.0
    %137 = vmatpush1.msra.mxu0 0.0
    %138 = vmatprep.subr.mxu0 0.0
    %139 = vmatpush1.msra.mxu0 0.0
    %140 = vmatprep.subr.mxu0 0.0
    %141 = vmatpush1.msra.mxu0 0.0
    %142 = vmatprep.subr.mxu0 0.0
    %143 = vmatpush1.msra.mxu0 0.0
    %144 = vmatprep.subr.mxu0 0.0
    %145 = vmatpush1.msra.mxu0 0.0
    %146 = vmatprep.subr.mxu0 0.0
    %147 = vmatpush1.msra.mxu0 0.0
    %148 = vmatprep.subr.mxu0 0.0
    %149 = vmatpush1.msra.mxu0 0.0
    %150 = vmatprep.subr.mxu0 0.0
    %151 = vmatpush1.msra.mxu0 0.0
    %152 = vmatprep.subr.mxu0 0.0
    %153 = vmatpush1.msra.mxu0 0.0
    %154 = vmatprep.subr.mxu0 0.0
    %155 = vmatpush1.msra.mxu0 0.0
    %156 = vmatprep.subr.mxu0 0.0
    %157 = vmatpush1.msra.mxu0 0.0
    %158 = vmatprep.mubr.f32.mxu0 0.0
    %159 = vmatmul.mubr.f32.gmra.mrb[0].mxu0 %v92
    %v160 = vpop.f32.mrb[0].mxu0
    %v161 = vadd.f32 %v89, %v160
    %v162 = vpop.f32.mrb[0].mxu0
    %163 = vdwg.mxu0
    %v164 = vmul.f32 %v161, 0.5
    %v165 = vmul.f32 %v161, 0.70710677
    %v166 = verf.f32.pop %v165
    %v167 = vadd.f32 %v166, 1.0
    %v168 = vmul.f32 %v164, %v167
    %v169 = vlaneseq
    %v170 = vshrl.u32 %v169, 7
    %v171 = vsub.s32 0, %v170
    %v172 = vrot.slane %v83, %v171
    %vm173 = vcmask 523264
    %v175 = vsel %vm173, %v168, 0
    %177 = vmatprep.subr.mxu0 0.0
    %178 = vmatpush1.msra.mxu0 %v74
    %179 = vmatprep.subr.mxu0 0.0
    %180 = vmatpush1.msra.mxu0 %v75
    %181 = vmatprep.subr.mxu0 0.0
    %182 = vmatpush1.msra.mxu0 %v76
    %183 = vmatprep.subr.mxu0 0.0
    %184 = vmatpush1.msra.mxu0 %v77
    %185 = vmatprep.subr.mxu0 0.0
    %186 = vmatpush1.msra.mxu0 %v78
    %187 = vmatprep.subr.mxu0 0.0
    %188 = vmatpush1.msra.mxu0 %v79
    %189 = vmatprep.subr.mxu0 0.0
    %190 = vmatpush1.msra.mxu0 %v80
    %191 = vmatprep.subr.mxu0 0.0
    %192 = vmatpush1.msra.mxu0 %v81
    %193 = vmatprep.subr.mxu0 0.0
    %194 = vmatpush1.msra.mxu0 0.0
    %195 = vmatprep.subr.mxu0 0.0
    %196 = vmatpush1.msra.mxu0 0.0
    %197 = vmatprep.subr.mxu0 0.0
    %198 = vmatpush1.msra.mxu0 0.0
    %199 = vmatprep.subr.mxu0 0.0
    %200 = vmatpush1.msra.mxu0 0.0
    %201 = vmatprep.subr.mxu0 0.0
    %202 = vmatpush1.msra.mxu0 0.0
    %203 = vmatprep.subr.mxu0 0.0
    %204 = vmatpush1.msra.mxu0 0.0
    %205 = vmatprep.subr.mxu0 0.0
    %206 = vmatpush1.msra.mxu0 0.0
    %207 = vmatprep.subr.mxu0 0.0
    %208 = vmatpush1.msra.mxu0 0.0
    %209 = vmatprep.subr.mxu0 0.0
    %210 = vmatpush1.msra.mxu0 0.0
    %211 = vmatprep.subr.mxu0 0.0
    %212 = vmatpush1.msra.mxu0 0.0
    %213 = vmatprep.subr.mxu0 0.0
    %214 = vmatpush1.msra.mxu0 0.0
    %215 = vmatprep.subr.mxu0 0.0
    %216 = vmatpush1.msra.mxu0 0.0
    %217 = vmatprep.subr.mxu0 0.0
    %218 = vmatpush1.msra.mxu0 0.0
    %219 = vmatprep.subr.mxu0 0.0
    %220 = vmatpush1.msra.mxu0 0.0
    %221 = vmatprep.subr.mxu0 0.0
    %222 = vmatpush1.msra.mxu0 0.0
    %223 = vmatprep.subr.mxu0 0.0
    %224 = vmatpush1.msra.mxu0 0.0
    %225 = vmatprep.subr.mxu0 0.0
    %226 = vmatpush1.msra.mxu0 0.0
    %227 = vmatprep.subr.mxu0 0.0
    %228 = vmatpush1.msra.mxu0 0.0
    %229 = vmatprep.subr.mxu0 0.0
    %230 = vmatpush1.msra.mxu0 0.0
    %231 = vmatprep.subr.mxu0 0.0
    %232 = vmatpush1.msra.mxu0 0.0
    %233 = vmatprep.subr.mxu0 0.0
    %234 = vmatpush1.msra.mxu0 0.0
    %235 = vmatprep.subr.mxu0 0.0
    %236 = vmatpush1.msra.mxu0 0.0
    %237 = vmatprep.subr.mxu0 0.0
    %238 = vmatpush1.msra.mxu0 0.0
    %239 = vmatprep.subr.mxu0 0.0
    %240 = vmatpush1.msra.mxu0 0.0
    %241 = vmatprep.mubr.f32.mxu0 0.0
    %242 = vmatmul.mubr.f32.gmra.mrb[0].mxu0 %v175
    %v243 = vpop.f32.mrb[0].mxu0
    %v244 = vadd.f32 %v172, %v243
    %v245 = vpop.f32.mrb[0].mxu0
    %246 = vdwg.mxu0
    %v247 = vadd.f32 %v244, %v161
    %v248 = vsel %vm173, %v247, 0.0
    %249 = vadd.xlane.f32.xlu0 %v248
    %v250 = vpop.xlane.xlu0 %249
    %v251 = vrcp.pop 64.0
    %v252 = vmul.f32 %v250, %v251
    %v253 = vsub.f32 %v247, %v252
    %v254 = vmul.f32 %v253, %v253
    %v255 = vsel %vm173, %v254, 0.0
    %256 = vadd.xlane.f32.xlu0 %v255
    %v257 = vpop.xlane.xlu0 %256
    %v258 = vmul.f32 %v257, %v251
    %v259 = vadd.f32 %v258, 1e-05
    %v260 = vrsqrt.pop %v259
    %v261 = vmul.f32 %v253, %v260
    %v262 = vlaneseq
    %v263 = vshrl.u32 %v262, 7
    %v264 = vsub.s32 0, %v263
    %v265 = vrot.slane %v84, %v264
    %v266 = vmul.f32 %v261, %v265
    %v267 = vlaneseq
    %v268 = vshrl.u32 %v267, 7
    %v269 = vsub.s32 0, %v268
    %v270 = vrot.slane %v85, %v269
    %v271 = vadd.f32 %v266, %v270
    %272 = vst.msk [vmem:[#allocation10] sm:$0xff] %vm173, %v271
    // Predicated region
    $region34: #{projection_head.1} parent=1 // pred_check
      _
    $region35: #{projection_head.1} parent=1 // pred_check_branch
      %274 = sbr.rel (0) target = $region37
    $region36: #{projection_head.1} parent=1 // pred_region
      %s276 = ssub.s32 128, 128
      %277 = vsyncadd [#allocation4], %s276
      %s279 = sshll.u32 [#allocation10], 4
      %s280 = int_to_ptr.vmem [resolvable:$true] %s279
      %282 = dma.vmem_to_hbm [thread:$0]  %s280, 128, %s4, [#allocation4]
    $region37: #{projection_head.1} parent=1 // pred_fallthru
      _
    // Predicated region
    $region38: #{projection_head.1} parent=1 // pred_check
      _
    $region39: #{projection_head.1} parent=1 // pred_check_branch
      %284 = sbr.rel (0) target = $region41
    $region40: #{projection_head.1} parent=1 // pred_region
      %285 = dma.done [#allocation4], 128
    $region41: #{projection_head.1} parent=1 // pred_fallthru
      _
    %286 = vsyncpa [#allocation3], 1
    %287 = vsyncpa [#allocation6], 1
    %288 = vsyncpa [#allocation9], 1
    %289 = vsyncpa [#allocation4], 1

</llo_original>
